<compile_context>
chip_gen: v5e
topology: v5e:2x2
jax: 0.10.0
libtpu: 0.0.40
codegen_flags: <defaults>
</compile_context>

<pallas_src>
import functools

import jax
import jax.numpy as jnp
import numpy as np
from jax.experimental import pallas as pl
from jax.experimental.pallas import tpu as pltpu


def _round_up(x, m):
    return ((x + m - 1) // m) * m


def _vmem_capacity_bytes():
    try:
        return int(pltpu.get_tpu_info().vmem_capacity_bytes)
    except Exception:
        return 64 * 1024 * 1024  # conservative (v7x per-TC)


def _num_tensorcores():
    try:
        info = pltpu.get_tpu_info()
        for attr in ("num_cores", "tensorcores_per_chip", "num_tensorcores",
                     "core_count"):
            v = getattr(info, attr, None)
            if v:
                return max(1, int(v))
    except Exception:
        pass
    return 1


def _fused_per_row(pred_ref, target_ref, *, confidence, off_value):
    """per_row = sum(-true_dist * log_softmax(logits)) for one (TN, C) tile."""
    logits = pred_ref[...].astype(jnp.float32)                     # (TN, C)
    m = jnp.max(logits, axis=-1, keepdims=True)                    # (TN, 1)
    shifted = logits - m                                           # (TN, C)
    # EUP exp + one XLU reduce.
    lse_s = jnp.log(jnp.sum(jnp.exp(shifted), axis=-1, keepdims=True))

    tgt = target_ref[...]                                          # (TN, 1) i32
    col = jax.lax.broadcasted_iota(jnp.int32, shifted.shape, 1)    # (TN, C)
    onehot = col == tgt                                            # (TN, C)
    coef = jnp.where(onehot, confidence, off_value)                # true_dist
    combined = jnp.sum(coef * shifted, axis=-1, keepdims=True)     # one reduce

    # coef sums to 1 per row, so the max-shift terms cancel exactly.
    per_row = lse_s - combined                                     # (TN, 1)
    return per_row, onehot


def _ls_kernel_noweight(pred_ref, target_ref, loss_out_ref, loss_acc_ref,
                        *, confidence, off_value, n_rows, tile_n,
                        tiles_per_part):
    p = pl.program_id(0)   # partition (TensorCore shard on v7x)
    i = pl.program_id(1)   # row-tile within the partition

    @pl.when(i == 0)
    def _():
        loss_acc_ref[...] = jnp.zeros_like(loss_acc_ref)

    per_row, _ = _fused_per_row(pred_ref, target_ref,
                                confidence=confidence, off_value=off_value)

    base = (p * tiles_per_part + i) * tile_n
    row = base + jax.lax.broadcasted_iota(jnp.int32, per_row.shape, 0)
    valid_f = (row < n_rows).astype(jnp.float32)

    loss_acc_ref[...] += per_row * valid_f

    @pl.when(i == pl.num_programs(1) - 1)
    def _():
        loss_out_ref[...] = jnp.sum(loss_acc_ref[...], keepdims=True)


def _ls_kernel_weight(pred_ref, target_ref, weight_ref,
                      loss_out_ref, w_out_ref,
                      loss_acc_ref, w_acc_ref,
                      *, confidence, off_value, n_rows, tile_n,
                      tiles_per_part):
    p = pl.program_id(0)
    i = pl.program_id(1)

    @pl.when(i == 0)
    def _():
        loss_acc_ref[...] = jnp.zeros_like(loss_acc_ref)
        w_acc_ref[...] = jnp.zeros_like(w_acc_ref)

    per_row, onehot = _fused_per_row(pred_ref, target_ref,
                                     confidence=confidence,
                                     off_value=off_value)

    # weight[target] gather via the same one-hot mask.
    w_n = jnp.sum(jnp.where(onehot, weight_ref[...], 0.0),
                  axis=-1, keepdims=True)                          # (TN, 1)

    base = (p * tiles_per_part + i) * tile_n
    row = base + jax.lax.broadcasted_iota(jnp.int32, per_row.shape, 0)
    # Mask once; reuse the masked weight for both accumulators.
    w_masked = jnp.where(row < n_rows, w_n, 0.0)

    loss_acc_ref[...] += per_row * w_masked
    w_acc_ref[...] += w_masked

    @pl.when(i == pl.num_programs(1) - 1)
    def _():
        loss_out_ref[...] = jnp.sum(loss_acc_ref[...], keepdims=True)
        w_out_ref[...] = jnp.sum(w_acc_ref[...], keepdims=True)


def label_smoothing_loss(pred, target, weight=None, smoothing=0.0,
                         tile_n=None, num_partitions=None,
                         vmem_budget_bytes=8 * 1024 * 1024):
    """Pallas implementation of LabelSmoothingLoss.forward.

    pred:   (N, C) float (f32 or bf16; kept in native dtype in HBM)
    target: (N,)   int, values in [0, C-1]
    weight: (C,)   float or None (None takes a cheaper fast path)
    """
    n, c = pred.shape
    has_weight = weight is not None
    confidence = 1.0 - smoothing
    off_value = smoothing / (c - 1)   # matches PyTorch (errors if c == 1)

    vmem_cap = _vmem_capacity_bytes()
    if num_partitions is None:
        num_partitions = _num_tensorcores()
    num_partitions = max(1, int(num_partitions))

    itemsize = jnp.dtype(pred.dtype).itemsize
    pack = {1: 32, 2: 16, 4: 8}.get(itemsize, 8)   # sublane packing per dtype
    n_scratch = 2 if has_weight else 1

    # Per-row VMEM: double-buffered pred, ~3 f32 (TN,C) in-kernel
    # intermediates (upcast/shifted/coef), double-buffered (TN,1) target and
    # the (TN,1) scratch accumulators (both lane-padded to 128).
    per_row_bytes = (2 * c * itemsize + 3 * c * 4
                     + 2 * 128 * 4 + n_scratch * 128 * 4)
    budget = min(int(vmem_budget_bytes), max(vmem_cap // 6, 2 * 1024 * 1024))
    if tile_n is None:
        tile_n = max(1, budget // per_row_bytes)
        tile_n = min(tile_n, pl.cdiv(n, num_partitions))
    tile_n = max(pack, _round_up(int(tile_n), pack))

    n_blocks = pl.cdiv(n, tile_n)
    tiles_per_part = pl.cdiv(n_blocks, num_partitions)
    max_block = n_blocks - 1

    target2d = target.astype(jnp.int32).reshape(n, 1)

    def _row_block(p, i):
        # Clamp so over-provisioned (p, i) pairs re-read a valid block;
        # the in-kernel row mask zeroes their contribution.
        return jnp.minimum(p * tiles_per_part + i, max_block)

    # Explicit scoped-VMEM limit sized from the actual tile (with headroom),
    # capped against the chip's physical VMEM.
    c_pad = _round_up(c, 128)
    vmem_est = (2 * tile_n * c_pad * itemsize       # pred double buffer
                + 4 * tile_n * c_pad * 4            # f32 intermediates
                + 2 * tile_n * 128 * 4              # target double buffer
                + n_scratch * tile_n * 128 * 4      # scratch accumulators
                + (2 * c_pad * 4 if has_weight else 0))
    vmem_limit = max(int(vmem_est) * 3 // 2, 16 * 1024 * 1024)
    vmem_limit = min(vmem_limit,
                     max(vmem_cap - 4 * 1024 * 1024, 16 * 1024 * 1024))

    cost = pl.CostEstimate(
        flops=int(7 * n * c),
        transcendentals=int(n * c + n),
        bytes_accessed=int(n * c * itemsize + n * 4
                           + (c * 4 if has_weight else 0)
                           + 2 * num_partitions * 4),
    )
    cparams = pltpu.CompilerParams(
        dimension_semantics=("parallel", "arbitrary"),
        vmem_limit_bytes=int(vmem_limit),
    )

    common = dict(confidence=float(confidence), off_value=float(off_value),
                  n_rows=int(n), tile_n=int(tile_n),
                  tiles_per_part=int(tiles_per_part))

    if has_weight:
        weight2d = weight.astype(jnp.float32).reshape(1, c)
        kernel = functools.partial(_ls_kernel_weight, **common)
        loss_parts, w_parts = pl.pallas_call(
            kernel,
            out_shape=(jax.ShapeDtypeStruct((num_partitions, 1), jnp.float32),
                       jax.ShapeDtypeStruct((num_partitions, 1), jnp.float32)),
            grid_spec=pltpu.PrefetchScalarGridSpec(
                num_scalar_prefetch=0,
                grid=(num_partitions, tiles_per_part),
                in_specs=[
                    pl.BlockSpec((tile_n, c),
                                 lambda p, i: (_row_block(p, i), 0)),
                    pl.BlockSpec((tile_n, 1),
                                 lambda p, i: (_row_block(p, i), 0)),
                    pl.BlockSpec((1, c), lambda p, i: (0, 0)),
                ],
                out_specs=[
                    pl.BlockSpec((1, 1), lambda p, i: (p, 0)),
                    pl.BlockSpec((1, 1), lambda p, i: (p, 0)),
                ],
                scratch_shapes=[
                    pltpu.VMEM((tile_n, 1), jnp.float32),
                    pltpu.VMEM((tile_n, 1), jnp.float32),
                ],
            ),
            compiler_params=cparams,
            cost_estimate=cost,
        )(pred, target2d, weight2d)
        # mean(weighted_loss) * N / sum(w)  ==  sum(weighted_loss) / sum(w)
        return jnp.sum(loss_parts) / jnp.sum(w_parts)

    # weight=None fast path: unit weights, sum(weight[target]) == N.
    kernel = functools.partial(_ls_kernel_noweight, **common)
    loss_parts = pl.pallas_call(
        kernel,
        out_shape=jax.ShapeDtypeStruct((num_partitions, 1), jnp.float32),
        grid_spec=pltpu.PrefetchScalarGridSpec(
            num_scalar_prefetch=0,
            grid=(num_partitions, tiles_per_part),
            in_specs=[
                pl.BlockSpec((tile_n, c), lambda p, i: (_row_block(p, i), 0)),
                pl.BlockSpec((tile_n, 1), lambda p, i: (_row_block(p, i), 0)),
            ],
            out_specs=pl.BlockSpec((1, 1), lambda p, i: (p, 0)),
            scratch_shapes=[pltpu.VMEM((tile_n, 1), jnp.float32)],
        ),
        compiler_params=cparams,
        cost_estimate=cost,
    )(pred, target2d)
    return jnp.sum(loss_parts) / float(n)


def _reference(pred, target, weight, smoothing):
    n, c = pred.shape
    logp = jax.nn.log_softmax(pred.astype(jnp.float32), axis=-1)
    true_dist = jnp.full((n, c), smoothing / (c - 1), dtype=jnp.float32)
    true_dist = true_dist.at[jnp.arange(n), target].set(1.0 - smoothing)
    w = (jnp.ones((c,), jnp.float32) if weight is None
         else weight.astype(jnp.float32))[target]
    weighted = jnp.sum(-true_dist * logp, axis=-1) * w
    return jnp.mean(weighted) * w.size / jnp.sum(w)


if __name__ == "__main__":
    key = jax.random.PRNGKey(0)
    kp, kt, kw = jax.random.split(key, 3)

    n, c = 16, 32                      # small demo shapes: N rows, C classes
    smoothing = 0.1

    pred = jax.random.normal(kp, (n, c), dtype=jnp.float32)
    target = jax.random.randint(kt, (n,), 0, c, dtype=jnp.int32)
    weight = jax.random.uniform(kw, (c,), dtype=jnp.float32,
                                minval=0.5, maxval=1.5)

    # Case 1: weight=None fast path (matches module's default weight=ones).
    loss0 = jax.block_until_ready(
        label_smoothing_loss(pred, target, weight=None, smoothing=smoothing))
    ref0 = _reference(pred, target, None, smoothing)
    assert np.allclose(np.asarray(loss0), np.asarray(ref0),
                       rtol=1e-5, atol=1e-5), (float(loss0), float(ref0))

    # Case 2: explicit per-class weights.
    loss1 = jax.block_until_ready(
        label_smoothing_loss(pred, target, weight=weight, smoothing=smoothing))
    ref1 = _reference(pred, target, weight, smoothing)
    assert np.allclose(np.asarray(loss1), np.asarray(ref1),
                       rtol=1e-5, atol=1e-5), (float(loss1), float(ref1))

    print("KERNEL_OK")
</pallas_src>

<mosaic_0001>
module attributes {stable_mosaic.version = 11 : i64} {
  func.func @_ls_kernel_noweight(%arg0: i32, %arg1: i32, %arg2: memref<16x32xf32, #tpu.memory_space<vmem>>, %arg3: memref<16x1xi32, #tpu.memory_space<vmem>>, %arg4: memref<1x1xf32, #tpu.memory_space<vmem>>, %arg5: memref<16x1xf32, #tpu.memory_space<vmem>>) attributes {dimension_semantics = [#tpu.dimension_semantics<parallel>, #tpu.dimension_semantics<arbitrary>], iteration_bounds = array<i64: 1, 1>, scalar_prefetch = 0 : i64, scratch_operands = 1 : i64, tpu.core_type = #tpu.core_type<tc>, window_params = [{transform_indices = @transform_0, window_bounds = array<i64: 16, 32>}, {transform_indices = @transform_1, window_bounds = array<i64: 16, 1>}, {transform_indices = @transform_2, window_bounds = array<i64: 1, 1>}]} {
    %c0_i32 = arith.constant 0 : i32
    %0 = arith.cmpi eq, %arg1, %c0_i32 : i32
    %1 = arith.extui %0 : i1 to i32
    %c0_i32_0 = arith.constant 0 : i32
    %2 = arith.cmpi ne, %1, %c0_i32_0 : i32
    scf.if %2 {
      %cst_15 = arith.constant 0.000000e+00 : f32
      %40 = vector.broadcast %cst_15 : f32 to vector<16x1xf32>
      %c0_16 = arith.constant 0 : index
      %c0_17 = arith.constant 0 : index
      %41 = vector.load %arg5[%c0_16, %c0_17] : memref<16x1xf32, #tpu.memory_space<vmem>>, vector<16x1xf32>
      tpu.vector_store %arg5[%c0_16, %c0_17], %40 {strides = array<i32>} : memref<16x1xf32, #tpu.memory_space<vmem>>, vector<16x1xf32>,
    } else {
    }
    %c0 = arith.constant 0 : index
    %c0_1 = arith.constant 0 : index
    %3 = vector.load %arg2[%c0, %c0_1] : memref<16x32xf32, #tpu.memory_space<vmem>>, vector<16x32xf32>
    %cst = arith.constant dense<0xFF800000> : vector<16xf32>
    %4 = vector.multi_reduction <maximumf>, %3, %cst [1] : vector<16x32xf32> to vector<16xf32>
    %5 = vector.shape_cast %4 : vector<16xf32> to vector<16x1xf32>
    %6 = vector.broadcast %5 : vector<16x1xf32> to vector<16x32xf32>
    %7 = arith.subf %3, %6 : vector<16x32xf32>
    %8 = math.exp %7 : vector<16x32xf32>
    %cst_2 = arith.constant dense<0.000000e+00> : vector<16xf32>
    %9 = vector.multi_reduction <add>, %8, %cst_2 [1] : vector<16x32xf32> to vector<16xf32>
    %10 = vector.shape_cast %9 : vector<16xf32> to vector<16x1xf32>
    %11 = math.log %10 : vector<16x1xf32>
    %c0_3 = arith.constant 0 : index
    %c0_4 = arith.constant 0 : index
    %12 = vector.load %arg3[%c0_3, %c0_4] : memref<16x1xi32, #tpu.memory_space<vmem>>, vector<16x1xi32>
    %13 = tpu.iota {dimensions = array<i32: 1>} : vector<16x32xi32>
    %14 = vector.broadcast %12 : vector<16x1xi32> to vector<16x32xi32>
    %15 = arith.cmpi eq, %13, %14 : vector<16x32xi32>
    %cst_5 = arith.constant 0.899999976 : f32
    %cst_6 = arith.constant 0.0032258064 : f32
    %16 = vector.broadcast %cst_5 : f32 to vector<16x32xf32>
    %17 = vector.broadcast %cst_6 : f32 to vector<16x32xf32>
    %18 = arith.select %15, %16, %17 : vector<16x32xi1>, vector<16x32xf32>
    %19 = arith.mulf %18, %7 : vector<16x32xf32>
    %cst_7 = arith.constant dense<0.000000e+00> : vector<16xf32>
    %20 = vector.multi_reduction <add>, %19, %cst_7 [1] : vector<16x32xf32> to vector<16xf32>
    %21 = vector.shape_cast %20 : vector<16xf32> to vector<16x1xf32>
    %22 = arith.subf %11, %21 : vector<16x1xf32>
    %c1_i32 = arith.constant 1 : i32
    %23 = arith.muli %arg0, %c1_i32 : i32
    %24 = arith.addi %23, %arg1 : i32
    %c16_i32 = arith.constant 16 : i32
    %25 = arith.muli %24, %c16_i32 : i32
    %26 = tpu.iota {dimensions = array<i32: 0>} : vector<16x1xi32>
    %27 = vector.broadcast %25 : i32 to vector<16x1xi32>
    %28 = arith.addi %27, %26 : vector<16x1xi32>
    %c16_i32_8 = arith.constant 16 : i32
    %29 = vector.broadcast %c16_i32_8 : i32 to vector<16x1xi32>
    %30 = arith.cmpi slt, %28, %29 : vector<16x1xi32>
    %31 = arith.extui %30 : vector<16x1xi1> to vector<16x1xi32>
    %32 = arith.sitofp %31 : vector<16x1xi32> to vector<16x1xf32>
    %c0_9 = arith.constant 0 : index
    %c0_10 = arith.constant 0 : index
    %33 = vector.load %arg5[%c0_9, %c0_10] : memref<16x1xf32, #tpu.memory_space<vmem>>, vector<16x1xf32>
    %34 = arith.mulf %22, %32 : vector<16x1xf32>
    %35 = arith.addf %33, %34 : vector<16x1xf32>
    %c0_11 = arith.constant 0 : index
    %c0_12 = arith.constant 0 : index
    %36 = vector.load %arg5[%c0_11, %c0_12] : memref<16x1xf32, #tpu.memory_space<vmem>>, vector<16x1xf32>
    tpu.vector_store %arg5[%c0_11, %c0_12], %35 {strides = array<i32>} : memref<16x1xf32, #tpu.memory_space<vmem>>, vector<16x1xf32>,
    %c0_i32_13 = arith.constant 0 : i32
    %37 = arith.cmpi eq, %arg1, %c0_i32_13 : i32
    %38 = arith.extui %37 : i1 to i32
    %c0_i32_14 = arith.constant 0 : i32
    %39 = arith.cmpi ne, %38, %c0_i32_14 : i32
    scf.if %39 {
      %c0_15 = arith.constant 0 : index
      %c0_16 = arith.constant 0 : index
      %40 = vector.load %arg5[%c0_15, %c0_16] : memref<16x1xf32, #tpu.memory_space<vmem>>, vector<16x1xf32>
      %41 = vector.shape_cast %40 : vector<16x1xf32> to vector<1x16x1xf32>
      %cst_17 = arith.constant dense<0.000000e+00> : vector<1xf32>
      %42 = vector.multi_reduction <add>, %41, %cst_17 [1, 2] : vector<1x16x1xf32> to vector<1xf32>
      %43 = vector.shape_cast %42 : vector<1xf32> to vector<1x1x1xf32>
      %44 = vector.extract %43[0, 0, 0] : f32 from vector<1x1x1xf32>
      %45 = vector.broadcast %44 : f32 to vector<1x1xf32>
      %c0_18 = arith.constant 0 : index
      %c0_19 = arith.constant 0 : index
      %46 = vector.load %arg4[%c0_18, %c0_19] : memref<1x1xf32, #tpu.memory_space<vmem>>, vector<1x1xf32>
      tpu.vector_store %arg4[%c0_18, %c0_19], %45 {strides = array<i32>} : memref<1x1xf32, #tpu.memory_space<vmem>>, vector<1x1xf32>,
    } else {
    }
    return
  }
  func.func @transform_0(%arg0: i32, %arg1: i32) -> (i32, i32) {
    %c1_i32 = arith.constant 1 : i32
    %0 = arith.muli %arg0, %c1_i32 : i32
    %1 = arith.addi %0, %arg1 : i32
    %c0_i32 = arith.constant 0 : i32
    %2 = arith.minsi %1, %c0_i32 : i32
    %c0_i32_0 = arith.constant 0 : i32
    %c0_i32_1 = arith.constant 0 : i32
    return %2, %c0_i32_0 : i32, i32
  }
  func.func @transform_1(%arg0: i32, %arg1: i32) -> (i32, i32) {
    %c1_i32 = arith.constant 1 : i32
    %0 = arith.muli %arg0, %c1_i32 : i32
    %1 = arith.addi %0, %arg1 : i32
    %c0_i32 = arith.constant 0 : i32
    %2 = arith.minsi %1, %c0_i32 : i32
    %c0_i32_0 = arith.constant 0 : i32
    %c0_i32_1 = arith.constant 0 : i32
    return %2, %c0_i32_0 : i32, i32
  }
  func.func @transform_2(%arg0: i32, %arg1: i32) -> (i32, i32) {
    %c0_i32 = arith.constant 0 : i32
    %c0_i32_0 = arith.constant 0 : i32
    return %arg0, %c0_i32 : i32, i32
  }
}

</mosaic_0001>

<llo_original>
// kernel: tpu_custom_call.1
$region0: #{tpu_custom_call.1}
  #allocation0 [shape = 'u32[]', space=smem, size = 0x4, offset = 0x4, fixed_abs, tag = 'smem constant byte address 0x4 - core index']
  #allocation1 [shape = 'u32[72,128]{1,0:T(1,128)}', space=vmem, size = 0x9000, scoped, tag = 'internal scratch']
  #allocation2 [shape = 'f32[16,1]{1,0:T(8,128)}', space=vmem, size = 0x2000, scoped, tag = 'scratch operand']
  %s0 = inlined_call_operand.vmem [shape: f32[16,32], index: 0, kind: input, shape index: {}]
  %s1 = inlined_call_operand.vmem [shape: s32[16,1], index: 1, kind: input, shape index: {}]
  %s2 = inlined_call_operand.hbm [shape: f32[1,1], index: 2, kind: output, shape index: {}]
  %s3 = sld [smem:[#allocation0]]
  $region26: #{tpu_custom_call.1} parent=0
    _
  %s5 = ssub.s32 1, %s3
  %s6 = scalar_select 0, %s5, %s3
  $region1: #{tpu_custom_call.1} parent=0
    #allocation3 [shape = 'u8[512]{0}', space=vmem, size = 0x400, scoped, tag = 'output window, operand 0, single buffered']
    #allocation4 [shape = 's32[1]{0}', space=sflag, size = 0x4, scoped, tag = 'scoped memory for tpu_custom_call.1']
    %7 = vsyncpa [#allocation4], 0
    // Predicated region
    $region2: #{tpu_custom_call.1} parent=1 // pred_check
      _
    $region3: #{tpu_custom_call.1} parent=1 // pred_check_branch
      %9 = sbr.rel (0) target = $region5
    $region4: #{tpu_custom_call.1} parent=1 // pred_region
      %s10 = sadd.s32 0, 0
      %p11 = scmp.lt.s32.totalorder %s10, 0
      %s12 = scalar_select %p11, %s10, 0
      %s13 = smul.u32 2, %s12
      %p14 = scmp.lt.s32.totalorder %s13, 1
      %s15 = scalar_select %p14, %s13, 1
      %s16 = smul.addr %s15, 8
      %s17 = scalar_lea.vmem %s0, %s16
      %s18 = sadd.s32 0, 0
      %p19 = scmp.lt.s32.totalorder %s18, 0
      %s20 = scalar_select %p19, %s18, 0
      %s21 = smul.u32 2, %s20
    $region5: #{tpu_custom_call.1} parent=1 // pred_fallthru
      _
    // Predicated region
    $region6: #{tpu_custom_call.1} parent=1 // pred_check
      _
    $region7: #{tpu_custom_call.1} parent=1 // pred_check_branch
      %23 = sbr.rel (0) target = $region9
    $region8: #{tpu_custom_call.1} parent=1 // pred_region
      %s24 = sadd.s32 0, 0
      %p25 = scmp.lt.s32.totalorder %s24, 0
      %s26 = scalar_select %p25, %s24, 0
      %s27 = smul.u32 2, %s26
      %p28 = scmp.lt.s32.totalorder %s27, 1
      %s29 = scalar_select %p28, %s27, 1
      %s30 = smul.addr %s29, 8
      %s31 = scalar_lea.vmem %s1, %s30
      %s32 = sadd.s32 0, 0
      %p33 = scmp.lt.s32.totalorder %s32, 0
      %s34 = scalar_select %p33, %s32, 0
      %s35 = smul.u32 2, %s34
    $region9: #{tpu_custom_call.1} parent=1 // pred_fallthru
      _
    %s36 = sadd.s32 0, 0
    %p37 = scmp.lt.s32.totalorder %s36, 0
    %s38 = scalar_select %p37, %s36, 0
    %s39 = smul.u32 2, %s38
    %p40 = scmp.lt.s32.totalorder %s39, 1
    %s41 = scalar_select %p40, %s39, 1
    %s42 = smul.addr %s41, 8
    %s43 = scalar_lea.vmem %s0, %s42
    %s44 = sadd.s32 0, 0
    %p45 = scmp.lt.s32.totalorder %s44, 0
    %s46 = scalar_select %p45, %s44, 0
    %s47 = smul.u32 2, %s46
    %p48 = scmp.lt.s32.totalorder %s47, 1
    %s49 = scalar_select %p48, %s47, 1
    %s50 = smul.addr %s49, 8
    %s51 = scalar_lea.vmem %s1, %s50
    %s52 = sadd.s32 0, 0
    %p53 = scmp.lt.s32.totalorder %s52, 0
    %s54 = scalar_select %p53, %s52, 0
    %s55 = smul.u32 2, %s54
    %p56 = scmp.lt.s32.totalorder %s55, 1
    %s57 = scalar_select %p56, %s55, 1
    %s58 = smul.addr %s57, 8
    %s59 = scalar_lea.vmem %s0, %s58
    %s60 = sadd.s32 0, 0
    %p61 = scmp.lt.s32.totalorder %s60, 0
    %s62 = scalar_select %p61, %s60, 0
    %s63 = smul.u32 2, %s62
    %s64 = sadd.s32 0, 0
    %p65 = scmp.lt.s32.totalorder %s64, 0
    %s66 = scalar_select %p65, %s64, 0
    %s67 = smul.u32 2, %s66
    %p68 = scmp.lt.s32.totalorder %s67, 1
    %s69 = scalar_select %p68, %s67, 1
    %s70 = smul.addr %s69, 8
    %s71 = scalar_lea.vmem %s1, %s70
    %s72 = sadd.s32 0, 0
    %p73 = scmp.lt.s32.totalorder %s72, 0
    %s74 = scalar_select %p73, %s72, 0
    %s75 = smul.u32 2, %s74
    %p76 = scmp.eq.s32.totalorder 0, 0
    // Predicated region
    $region10: #{tpu_custom_call.1} parent=1 // pred_check
      %p77 = pneg %p76
    $region11: #{tpu_custom_call.1} parent=1 // pred_check_branch
      %79 = sbr.rel (%p77) target = $region13
    $region12: #{tpu_custom_call.1} parent=1 // pred_region
      %vm80 = vcmask 7168
      %81 = vst.msk [vmem:[#allocation2] sm:$0xff] %vm80, 0.0
      %82 = vst.msk [vmem:[#allocation2 + $0x8] sm:$0xff] %vm80, 0.0
    $region13: #{tpu_custom_call.1} parent=1 // pred_fallthru
      _
    %v83 = vld [vmem:[%s59] sm:$0xff]
    %v84 = vld [vmem:[%s59 + $0x8] sm:$0xff]
    %vm85 = vcmask 261120
    %v86 = vsel %vm85, %v83, -inf
    %87 = vmax.xlane.f32.xlu0 %v86
    %v88 = vpop.xlane.xlu0 %87
    %v89 = vsel %vm85, %v84, -inf
    %90 = vmax.xlane.f32.xlu0 %v89
    %v91 = vpop.xlane.xlu0 %90
    %v92 = vsub.f32 %v83, %v88
    %v93 = vsub.f32 %v84, %v91
    %v94 = vmul.f32 %v92, 1.442695
    %v95 = vpow.pop %v94
    %v96 = vmul.f32 %v93, 1.442695
    %v97 = vpow.pop %v96
    %v98 = vsel %vm85, %v95, 0.0
    %99 = vadd.xlane.f32.xlu0 %v98
    %v100 = vpop.xlane.xlu0 %99
    %v101 = vsel %vm85, %v97, 0.0
    %102 = vadd.xlane.f32.xlu0 %v101
    %v103 = vpop.xlane.xlu0 %102
    %v104 = vlog2.pop %v100
    %v105 = vmul.f32 %v104, 0.6931472
    %v106 = vlog2.pop %v103
    %v107 = vmul.f32 %v106, 0.6931472
    %v108 = vld [vmem:[%s71] sm:$0xff]
    %v109 = vld [vmem:[%s71 + $0x8] sm:$0xff]
    %v110 = vlaneseq
    %v111 = vand.u32 %v110, 127
    %112 = vset.pattern.permute.xlu0 0
    %113 = vperm.xlu0 %112, %v108
    %v114 = vpop.permute.xlu0 %113
    %115 = vset.pattern.permute.xlu0 0
    %116 = vperm.xlu0 %115, %v109
    %v117 = vpop.permute.xlu0 %116
    %vm118 = vcmp.eq.s32.totalorder %v111, %v114
    %vm119 = vcmp.eq.s32.totalorder %v111, %v117
    %v120 = vsel %vm118, 0.9, 0.0032258064
    %v121 = vsel %vm119, 0.9, 0.0032258064
    %v122 = vmul.f32 %v120, %v92
    %v123 = vmul.f32 %v121, %v93
    %v124 = vsel %vm85, %v122, 0.0
    %125 = vadd.xlane.f32.xlu0 %v124
    %v126 = vpop.xlane.xlu0 %125
    %v127 = vsel %vm85, %v123, 0.0
    %128 = vadd.xlane.f32.xlu0 %v127
    %v129 = vpop.xlane.xlu0 %128
    %v130 = vsub.f32 %v105, %v126
    %v131 = vsub.f32 %v107, %v129
    %s132 = sadd.s32 0, 0
    %s133 = smul.u32 %s132, 16
    %v134 = vlaneseq
    %v135 = vshrl.u32 %v134, 7
    %v136 = vadd.s32 %v135, 8
    %v137 = vstv %s133
    %v138 = vadd.s32 %v137, %v135
    %v139 = vadd.s32 %v137, %v136
    %vm140 = vcmp.lt.s32.totalorder %v138, 16
    %vm141 = vcmp.lt.s32.totalorder %v139, 16
    %v142 = vsel %vm140, 1, 0
    %v143 = vsel %vm141, 1, 0
    %v144 = vcvt.s32.f32 %v142
    %v145 = vcvt.s32.f32 %v143
    %v146 = vld [vmem:[#allocation2] sm:$0xff]
    %v147 = vld [vmem:[#allocation2 + $0x8] sm:$0xff]
    %v148 = vmul.f32 %v130, %v144
    %v149 = vmul.f32 %v131, %v145
    %v150 = vadd.f32 %v146, %v148
    %v151 = vadd.f32 %v147, %v149
    %vm152 = vcmask 7168
    %153 = vst.msk [vmem:[#allocation2] sm:$0xff] %vm152, %v150
    %154 = vst.msk [vmem:[#allocation2 + $0x8] sm:$0xff] %vm152, %v151
    // Predicated region
    $region14: #{tpu_custom_call.1} parent=1 // pred_check
      %p155 = pneg %p76
    $region15: #{tpu_custom_call.1} parent=1 // pred_check_branch
      %157 = sbr.rel (%p155) target = $region17
    $region16: #{tpu_custom_call.1} parent=1 // pred_region
      %v158 = vld [vmem:[#allocation2] sm:$0xff]
      %v159 = vld [vmem:[#allocation2 + $0x8] sm:$0xff]
      %v160 = vsel %vm152, %v158, 0.0
      %v161 = vsel %vm152, %v159, 0.0
      %v162 = vadd.f32 %v160, %v161
      %163 = vadd.xlane.f32.xlu0 %v162
      %v164 = vpop.xlane.xlu0 %163
      %v165 = vrot.slane %v164, 4
      %v166 = vadd.f32 %v164, %v165
      %v167 = vrot.slane %v166, 2
      %v168 = vadd.f32 %v166, %v167
      %v169 = vrot.slane %v168, 1
      %v170 = vadd.f32 %v168, %v169
      %s171 = vtos %v170
      %v172 = vstv %s171
      %vm173 = vcmask 0
      %174 = vst.msk [vmem:[#allocation3] sm:$0x1] %vm173, %v172
    $region17: #{tpu_custom_call.1} parent=1 // pred_fallthru
      _
    // Predicated region
    $region18: #{tpu_custom_call.1} parent=1 // pred_check
      _
    $region19: #{tpu_custom_call.1} parent=1 // pred_check_branch
      %176 = sbr.rel (0) target = $region21
    $region20: #{tpu_custom_call.1} parent=1 // pred_region
      %178 = vsyncadd [#allocation4], 0
      %s180 = sshll.u32 [#allocation3], 4
      %s181 = int_to_ptr.vmem [resolvable:$true] %s180
      %s182 = sshll.u32 %s2, 4
      %s183 = int_to_ptr.hbm [resolvable:$true] %s182
      %185 = dma.vmem_to_hbm [thread:$0]  %s181, 16, %s183, [#allocation4]
    $region21: #{tpu_custom_call.1} parent=1 // pred_fallthru
      _
    // Predicated region
    $region22: #{tpu_custom_call.1} parent=1 // pred_check
      _
    $region23: #{tpu_custom_call.1} parent=1 // pred_check_branch
      %187 = sbr.rel (0) target = $region25
    $region24: #{tpu_custom_call.1} parent=1 // pred_region
      %189 = dma.done [#allocation4], 16
    $region25: #{tpu_custom_call.1} parent=1 // pred_fallthru
      _
    %190 = vsyncpa [#allocation4], 1

</llo_original>
